<compile_context>
chip_gen: v5e
topology: v5e:2x2
jax: 0.10.0
libtpu: 0.0.40
codegen_flags: <defaults>
</compile_context>

<pallas_src>
import functools

import jax
import jax.numpy as jnp
from jax import lax
from jax.experimental import pallas as pl
from jax.experimental.pallas import tpu as pltpu


# ----------------------------------------------------------------------------
# Prologue: row-normalize features once (F.normalize(features, dim=1)),
# folding sqrt(1/temperature) so the downstream matmul already yields sim/T.
# ----------------------------------------------------------------------------
def _normalize_kernel(f_ref, o_ref, *, scale):
    f = f_ref[...].astype(jnp.float32)                        # (TR, D)
    sumsq = jnp.sum(f * f, axis=1, keepdims=True)             # (TR, 1)
    # x / max(||x||, 1e-12)  ==  x * rsqrt(max(||x||^2, 1e-24))
    inv = lax.rsqrt(jnp.maximum(sumsq, 1e-24)) * scale         # EUP slot
    o_ref[...] = (f * inv).astype(o_ref.dtype)


def _normalize_features(features, block_rows, out_dtype, scale):
    B, D = features.shape
    return pl.pallas_call(
        functools.partial(_normalize_kernel, scale=float(scale)),
        out_shape=jax.ShapeDtypeStruct((B, D), out_dtype),
        grid_spec=pltpu.PrefetchScalarGridSpec(
            num_scalar_prefetch=0,
            grid=(B // block_rows,),
            in_specs=[pl.BlockSpec((block_rows, D), lambda i: (i, 0))],
            out_specs=pl.BlockSpec((block_rows, D), lambda i: (i, 0)),
        ),
        compiler_params=pltpu.CompilerParams(dimension_semantics=("parallel",)),
    )(features)


# ----------------------------------------------------------------------------
# Shared helpers for the main kernels.
# ----------------------------------------------------------------------------
def _accumulate(sumexp_acc, possim_acc, e, psim):
    """Lane-dense partial sums: plain VPU adds of 128-lane chunks into
    (TQ, L) f32 scratches.  The XLU reduction happens only in finalize."""
    lanes = sumexp_acc.shape[1]
    width = e.shape[1]
    se = sumexp_acc[...]
    ps = possim_acc[...]
    for c in range(width // lanes):                    # static, <= 4 chunks
        sl = slice(c * lanes, (c + 1) * lanes)
        se = se + e[:, sl]
        ps = ps + psim[:, sl]
    sumexp_acc[...] = se
    possim_acc[...] = ps


def _tile_contribution(logits, lq, lk, row0, col0, on_diag,
                       sumexp_acc, possim_acc, inv_temp):
    """Accumulate one (TQ, TK) logits tile.  Self-mask work is gated behind
    pl.when(on_diag) so off-diagonal tiles skip iotas/compares/selects."""
    tq, tk = logits.shape

    @pl.when(on_diag)
    def _diag():
        row_g = row0 + lax.broadcasted_iota(jnp.int32, (tq, tk), 0)
        col_g = col0 + lax.broadcasted_iota(jnp.int32, (tq, tk), 1)
        is_self = row_g == col_g
        pos = jnp.logical_and(lq == lk, jnp.logical_not(is_self))
        e = jnp.where(is_self, 0.0, jnp.exp(logits - inv_temp))
        _accumulate(sumexp_acc, possim_acc, e, jnp.where(pos, logits, 0.0))

    @pl.when(jnp.logical_not(on_diag))
    def _off():
        pos = lq == lk
        e = jnp.exp(logits - inv_temp)
        _accumulate(sumexp_acc, possim_acc, e, jnp.where(pos, logits, 0.0))


def _finalize(sumexp_acc, possim_acc, cnt_ref, loss_ref, inv_temp):
    # log(sum_{j != i} exp(logit_ij)) = 1/T + log(sum exp(logit_ij - 1/T))
    lse = inv_temp + jnp.log(jnp.sum(sumexp_acc[...], axis=1, keepdims=True))
    psum = jnp.sum(possim_acc[...], axis=1, keepdims=True)
    # loss_i = lse_i - (sum_pos logit) / count   (exact divide, runs once/block)
    # NOTE: rows whose class is a singleton have count == 0 -> inf/NaN, exactly
    # like the PyTorch module (semantics preserved).
    loss_ref[...] = lse - psum / cnt_ref[...]


# ----------------------------------------------------------------------------
# Variant A: keys resident in VMEM (1-D grid, in-kernel loop over key chunks).
# ----------------------------------------------------------------------------
def _supcon_resident_kernel(fq_ref, fk_ref, lq_ref, lk_ref, cnt_ref, loss_ref,
                            sumexp_acc, possim_acc, *, inv_temp):
    i = pl.program_id(0)
    tq = fq_ref.shape[0]
    nk, bk, _ = fk_ref.shape
    row0 = i * tq

    sumexp_acc[...] = jnp.zeros_like(sumexp_acc)
    possim_acc[...] = jnp.zeros_like(possim_acc)

    @pl.loop(0, nk)
    def _body(kk):
        col0 = kk * bk
        fk = fk_ref[kk]                       # (bk, D), already in VMEM
        lk = lk_ref[kk]                       # (1, bk)
        logits = lax.dot_general(
            fq_ref[...], fk,
            dimension_numbers=(((1,), (1,)), ((), ())),
            preferred_element_type=jnp.float32)          # (tq, bk) = sim / T
        on_diag = jnp.logical_and(row0 < col0 + bk, col0 < row0 + tq)
        _tile_contribution(logits, lq_ref[...], lk, row0, col0, on_diag,
                           sumexp_acc, possim_acc, inv_temp)

    _finalize(sumexp_acc, possim_acc, cnt_ref, loss_ref, inv_temp)


# ----------------------------------------------------------------------------
# Variant B: streamed keys (2-D grid, accumulator-resident reduction axis).
# ----------------------------------------------------------------------------
def _supcon_stream_kernel(fq_ref, fk_ref, lq_ref, lk_ref, cnt_ref, loss_ref,
                          sumexp_acc, possim_acc, *, inv_temp):
    i = pl.program_id(0)
    k = pl.program_id(1)
    tq = fq_ref.shape[0]
    tk = fk_ref.shape[0]
    row0 = i * tq
    col0 = k * tk

    @pl.when(k == 0)
    def _init():
        sumexp_acc[...] = jnp.zeros_like(sumexp_acc)
        possim_acc[...] = jnp.zeros_like(possim_acc)

    logits = lax.dot_general(
        fq_ref[...], fk_ref[...],
        dimension_numbers=(((1,), (1,)), ((), ())),
        preferred_element_type=jnp.float32)               # (tq, tk) = sim / T

    on_diag = jnp.logical_and(row0 < col0 + tk, col0 < row0 + tq)
    _tile_contribution(logits, lq_ref[...], lk_ref[...], row0, col0, on_diag,
                       sumexp_acc, possim_acc, inv_temp)

    @pl.when(k == pl.num_programs(1) - 1)
    def _fin():
        _finalize(sumexp_acc, possim_acc, cnt_ref, loss_ref, inv_temp)


# ----------------------------------------------------------------------------
# Wrapper.
# ----------------------------------------------------------------------------
def _pick_block_q(b):
    # Prefer >= 2 query blocks so the "parallel" axis can split across the
    # two TensorCores on v7x.
    for t in (512, 256, 128):
        if b % t == 0 and b // t >= 2:
            return t
    for t in (512, 256, 128):
        if b % t == 0:
            return t
    return b
    # TODO(synk): pad B up to a multiple of 128 (with query/key masking)
    # instead of falling back to awkward block sizes for odd batch sizes.


def _pick_block_k(b):
    for t in (512, 256, 128):
        if b % t == 0:
            return t
    return b


def _resident_key_budget_bytes():
    # Conservative: ~1/4 of physical VMEM (64 MiB on v7x -> 16 MiB of keys).
    try:
        vmem = int(pltpu.get_tpu_info().vmem_capacity_bytes)
    except Exception:
        vmem = 64 * 1024 * 1024
    return vmem // 4


def _vmem_limit(estimate_bytes):
    # Never request the full physical VMEM (v7x only has 64 MiB per TC).
    return int(min(max(estimate_bytes, 16 * 1024 * 1024), 48 * 1024 * 1024))


def contrastive_loss(features, labels, temperature=0.07,
                     matmul_dtype=jnp.bfloat16, block_q=None, block_k=None,
                     keys_resident=None):
    """Pallas TPU forward of ContrastiveLoss (contrast_mode unused in forward)."""
    B, D = features.shape
    block_q = _pick_block_q(B) if block_q is None else block_q
    block_k = _pick_block_k(B) if block_k is None else block_k
    assert B % block_q == 0 and B % block_k == 0, (B, block_q, block_k)

    inv_temp = float(1.0 / temperature)
    itemsize = jnp.dtype(matmul_dtype).itemsize

    # Normalize once; sqrt(1/T) folded so the MXU output is already sim / T.
    # TODO(synk): optionally zero-pad D up to a multiple of 128/256 here for
    # better MXU K-dim utilization on small embedding dims.
    f_norm = _normalize_features(features, min(block_q, B), matmul_dtype,
                                 scale=inv_temp ** 0.5)

    labels_i = labels.astype(jnp.int32)
    lcol = labels_i.reshape(B, 1)
    lrow = labels_i.reshape(1, B)
    # Per-row positive counts (excluding self), precomputed outside the kernel.
    counts = (jnp.sum((labels_i[:, None] == labels_i[None, :]).astype(jnp.float32),
                      axis=1, keepdims=True) - 1.0)

    key_bytes = B * D * itemsize
    if keys_resident is None:
        keys_resident = key_bytes <= _resident_key_budget_bytes()

    acc_lanes = min(block_k, 128)
    assert block_k % acc_lanes == 0

    if keys_resident:
        nk = B // block_k
        fk = f_norm.reshape(nk, block_k, D)
        lk = lrow.reshape(nk, 1, block_k)
        kernel = functools.partial(_supcon_resident_kernel, inv_temp=inv_temp)
        vmem_est = (2 * 2 * block_q * D * itemsize          # double-buffered q
                    + 2 * key_bytes                          # resident keys (+slack)
                    + 4 * block_q * acc_lanes * 4            # accumulators
                    + 4 * block_q * block_k * 4              # logits tile + temps
                    + (1 << 20))
        loss_rows = pl.pallas_call(
            kernel,
            out_shape=jax.ShapeDtypeStruct((B, 1), jnp.float32),
            grid_spec=pltpu.PrefetchScalarGridSpec(
                num_scalar_prefetch=0,
                grid=(B // block_q,),
                in_specs=[
                    pl.BlockSpec((block_q, D), lambda i: (i, 0)),        # queries
                    pl.BlockSpec((nk, block_k, D), lambda i: (0, 0, 0)),  # keys (resident)
                    pl.BlockSpec((block_q, 1), lambda i: (i, 0)),         # labels col
                    pl.BlockSpec((nk, 1, block_k), lambda i: (0, 0, 0)),  # labels row (resident)
                    pl.BlockSpec((block_q, 1), lambda i: (i, 0)),         # positive counts
                ],
                out_specs=pl.BlockSpec((block_q, 1), lambda i: (i, 0)),
                scratch_shapes=[pltpu.VMEM((block_q, acc_lanes), jnp.float32),
                                pltpu.VMEM((block_q, acc_lanes), jnp.float32)],
            ),
            compiler_params=pltpu.CompilerParams(
                dimension_semantics=("parallel",),
                vmem_limit_bytes=_vmem_limit(vmem_est),
            ),
        )(f_norm, fk, lcol, lk, counts)
    else:
        kernel = functools.partial(_supcon_stream_kernel, inv_temp=inv_temp)
        vmem_est = (2 * 2 * block_q * D * itemsize
                    + 2 * 2 * block_k * D * itemsize
                    + 4 * block_q * acc_lanes * 4
                    + 4 * block_q * block_k * 4
                    + (1 << 20))
        loss_rows = pl.pallas_call(
            kernel,
            out_shape=jax.ShapeDtypeStruct((B, 1), jnp.float32),
            grid_spec=pltpu.PrefetchScalarGridSpec(
                num_scalar_prefetch=0,
                grid=(B // block_q, B // block_k),
                in_specs=[
                    pl.BlockSpec((block_q, D), lambda i, k: (i, 0)),   # queries
                    pl.BlockSpec((block_k, D), lambda i, k: (k, 0)),   # keys (streamed)
                    pl.BlockSpec((block_q, 1), lambda i, k: (i, 0)),   # labels col
                    pl.BlockSpec((1, block_k), lambda i, k: (0, k)),   # labels row
                    pl.BlockSpec((block_q, 1), lambda i, k: (i, 0)),   # positive counts
                ],
                out_specs=pl.BlockSpec((block_q, 1), lambda i, k: (i, 0)),
                scratch_shapes=[pltpu.VMEM((block_q, acc_lanes), jnp.float32),
                                pltpu.VMEM((block_q, acc_lanes), jnp.float32)],
            ),
            compiler_params=pltpu.CompilerParams(
                dimension_semantics=("parallel", "arbitrary"),
                vmem_limit_bytes=_vmem_limit(vmem_est),
            ),
        )(f_norm, f_norm, lcol, lrow, counts)

    return jnp.mean(loss_rows)   # loss.mean() — tiny, left to XLA


# ----------------------------------------------------------------------------
# Pure-JAX reference (mirrors the PyTorch module).
# ----------------------------------------------------------------------------
def _reference(features, labels, temperature=0.07, matmul_dtype=jnp.float32):
    f = features.astype(jnp.float32)
    f = f / jnp.maximum(jnp.linalg.norm(f, axis=1, keepdims=True), 1e-12)
    fm = f.astype(matmul_dtype)
    sim = jnp.dot(fm, fm.T, preferred_element_type=jnp.float32) / temperature
    mask = (labels[:, None] == labels[None, :]).astype(jnp.float32)
    eye = jnp.eye(features.shape[0], dtype=jnp.float32)
    pos = mask - eye
    exp_logits = jnp.exp(sim) * (1.0 - eye)
    log_prob = sim - jnp.log(exp_logits.sum(1, keepdims=True))
    loss = -(pos * log_prob).sum(1) / pos.sum(1)
    return loss.mean()


if __name__ == "__main__":
    key = jax.random.PRNGKey(0)
    k1, k2, k3 = jax.random.split(key, 3)

    # --- Test 1: small shape, f32 path, keys-resident (strict parity) --------
    B1, D1 = 8, 32
    features1 = jax.random.normal(k1, (B1, D1), dtype=jnp.float32)
    # Every sample has at least one positive pair (avoids the 0/0 NaN that the
    # PyTorch module would also produce for singleton classes).
    labels1 = jnp.array([0, 0, 1, 1, 2, 2, 3, 3], dtype=jnp.int32)

    loss1 = contrastive_loss(features1, labels1, temperature=0.07,
                             matmul_dtype=jnp.float32)
    jax.block_until_ready(loss1)
    ref1 = _reference(features1, labels1, temperature=0.07,
                      matmul_dtype=jnp.float32)
    assert jnp.allclose(loss1, ref1, rtol=2e-3, atol=2e-3), (loss1, ref1)

    # --- Test 2: keys-resident path (grid 2, inner key loop), bf16 MXU -------
    B2, D2 = 256, 64
    features2 = jax.random.normal(k2, (B2, D2), dtype=jnp.float32).astype(jnp.bfloat16)
    labels2 = (jnp.arange(B2, dtype=jnp.int32) % 32)   # 8 members per class

    loss2 = contrastive_loss(features2, labels2, temperature=0.07,
                             matmul_dtype=jnp.bfloat16,
                             block_q=128, block_k=128)
    jax.block_until_ready(loss2)
    ref2 = _reference(features2, labels2, temperature=0.07,
                      matmul_dtype=jnp.bfloat16)
    # bf16 rounding realizations differ slightly (temperature folded pre-cast).
    assert jnp.allclose(loss2, ref2, rtol=1e-2, atol=1e-2), (loss2, ref2)

    # --- Test 3: streamed path (2x2 grid), f32 matmul (strict parity) --------
    B3, D3 = 256, 64
    features3 = jax.random.normal(k3, (B3, D3), dtype=jnp.float32)
    labels3 = (jnp.arange(B3, dtype=jnp.int32) % 64)   # 4 members per class

    loss3 = contrastive_loss(features3, labels3, temperature=0.07,
                             matmul_dtype=jnp.float32,
                             block_q=128, block_k=128, keys_resident=False)
    jax.block_until_ready(loss3)
    ref3 = _reference(features3, labels3, temperature=0.07,
                      matmul_dtype=jnp.float32)
    assert jnp.allclose(loss3, ref3, rtol=2e-3, atol=2e-3), (loss3, ref3)

    print("KERNEL_OK")
</pallas_src>

<mosaic_0001>
module attributes {stable_mosaic.version = 11 : i64} {
  func.func @_normalize_kernel(%arg0: i32, %arg1: memref<8x32xf32, #tpu.memory_space<vmem>>, %arg2: memref<8x32xf32, #tpu.memory_space<vmem>>) attributes {dimension_semantics = [#tpu.dimension_semantics<parallel>], iteration_bounds = array<i64: 1>, scalar_prefetch = 0 : i64, scratch_operands = 0 : i64, tpu.core_type = #tpu.core_type<tc>, window_params = [{transform_indices = @transform_0, window_bounds = array<i64: 8, 32>}, {transform_indices = @transform_1, window_bounds = array<i64: 8, 32>}]} {
    %c0 = arith.constant 0 : index
    %c0_0 = arith.constant 0 : index
    %0 = vector.load %arg1[%c0, %c0_0] : memref<8x32xf32, #tpu.memory_space<vmem>>, vector<8x32xf32>
    %1 = arith.mulf %0, %0 : vector<8x32xf32>
    %cst = arith.constant dense<0.000000e+00> : vector<8xf32>
    %2 = vector.multi_reduction <add>, %1, %cst [1] : vector<8x32xf32> to vector<8xf32>
    %3 = vector.shape_cast %2 : vector<8xf32> to vector<8x1xf32>
    %cst_1 = arith.constant 1.000000e-24 : f32
    %4 = vector.broadcast %cst_1 : f32 to vector<8x1xf32>
    %5 = arith.maximumf %3, %4 : vector<8x1xf32>
    %6 = math.rsqrt %5 : vector<8x1xf32>
    %cst_2 = arith.constant 3.77964473 : f32
    %7 = vector.broadcast %cst_2 : f32 to vector<8x1xf32>
    %8 = arith.mulf %6, %7 : vector<8x1xf32>
    %9 = vector.broadcast %8 : vector<8x1xf32> to vector<8x32xf32>
    %10 = arith.mulf %0, %9 : vector<8x32xf32>
    %c0_3 = arith.constant 0 : index
    %c0_4 = arith.constant 0 : index
    %11 = vector.load %arg2[%c0_3, %c0_4] : memref<8x32xf32, #tpu.memory_space<vmem>>, vector<8x32xf32>
    tpu.vector_store %arg2[%c0_3, %c0_4], %10 {strides = array<i32>} : memref<8x32xf32, #tpu.memory_space<vmem>>, vector<8x32xf32>,
    return
  }
  func.func @transform_0(%arg0: i32) -> (i32, i32) {
    %c0_i32 = arith.constant 0 : i32
    %c0_i32_0 = arith.constant 0 : i32
    return %arg0, %c0_i32 : i32, i32
  }
  func.func @transform_1(%arg0: i32) -> (i32, i32) {
    %c0_i32 = arith.constant 0 : i32
    %c0_i32_0 = arith.constant 0 : i32
    return %arg0, %c0_i32 : i32, i32
  }
}

</mosaic_0001>

<llo_original>
// kernel: tpu_custom_call.1
$region0: #{tpu_custom_call.1}
  #allocation0 [shape = 'u32[]', space=smem, size = 0x4, offset = 0x4, fixed_abs, tag = 'smem constant byte address 0x4 - core index']
  #allocation1 [shape = 'u32[72,128]{1,0:T(1,128)}', space=vmem, size = 0x9000, scoped, tag = 'internal scratch']
  %s0 = inlined_call_operand.hbm [shape: f32[8,32], index: 0, kind: input, shape index: {}]
  %s1 = inlined_call_operand.hbm [shape: f32[8,32], index: 1, kind: output, shape index: {}]
  %s2 = sld [smem:[#allocation0]]
  $region18: #{tpu_custom_call.1} parent=0
    _
  %s4 = ssub.s32 1, %s2
  %s5 = scalar_select 0, %s4, %s2
  $region1: #{tpu_custom_call.1} parent=0
    #allocation2 [shape = 'u8[4096]{0}', space=vmem, size = 0x1000, scoped, tag = 'input window, operand 0, single buffered']
    #allocation3 [shape = 's32[1]{0}', space=sflag, size = 0x4, scoped, tag = 'scoped memory for tpu_custom_call.1']
    #allocation4 [shape = 's32[1]{0}', space=sflag, size = 0x4, scoped, tag = 'scoped memory for tpu_custom_call.1']
    #allocation5 [shape = 'u8[4096]{0}', space=vmem, size = 0x1000, scoped, tag = 'output window, operand 0, single buffered']
    %6 = vsyncpa [#allocation3], 0
    %7 = vsyncpa [#allocation4], 0
    // Predicated region
    $region2: #{tpu_custom_call.1} parent=1 // pred_check
      _
    $region3: #{tpu_custom_call.1} parent=1 // pred_check_branch
      %9 = sbr.rel (0) target = $region5
    $region4: #{tpu_custom_call.1} parent=1 // pred_region
      %11 = vsyncadd [#allocation3], 0
      %s13 = sshll.u32 %s0, 4
      %s14 = int_to_ptr.hbm [resolvable:$true] %s13
      %s15 = sshll.u32 [#allocation2], 4
      %s16 = int_to_ptr.vmem [resolvable:$true] %s15
      %18 = dma.hbm_to_vmem [thread:$0]  %s14, 128, %s16, [#allocation3]
    $region5: #{tpu_custom_call.1} parent=1 // pred_fallthru
      _
    // Predicated region
    $region6: #{tpu_custom_call.1} parent=1 // pred_check
      _
    $region7: #{tpu_custom_call.1} parent=1 // pred_check_branch
      %20 = sbr.rel (0) target = $region9
    $region8: #{tpu_custom_call.1} parent=1 // pred_region
      %22 = dma.done [#allocation3], 128
    $region9: #{tpu_custom_call.1} parent=1 // pred_fallthru
      _
    %v23 = vld [vmem:[#allocation2] sm:$0xff]
    %v24 = vmul.f32 %v23, %v23
    %vm25 = vcmask 261120
    %v26 = vsel %vm25, %v24, 0.0
    %27 = vadd.xlane.f32.xlu0 %v26
    %v28 = vpop.xlane.xlu0 %27
    %v29 = vmax.f32 %v28, 1e-24
    %v30 = vrsqrt.pop %v29
    %v31 = vmul.f32 %v30, %v29
    %v32 = vmul.f32 %v31, %v30
    %v33 = vmul.f32 0.5, %v32
    %v34 = vsub.f32 1.5, %v33
    %v35 = vmul.f32 %v30, %v34
    %vm36 = vweird.f32 %v29
    %vm37 = vweird.f32 %v30
    %vm38 = vmor %vm36, %vm37
    %v39 = vsel %vm38, %v30, %v35
    %v40 = vmul.f32 %v39, 3.7796447
    %v41 = vmul.f32 %v23, %v40
    %42 = vst.msk [vmem:[#allocation5] sm:$0xff] %vm25, %v41
    // Predicated region
    $region10: #{tpu_custom_call.1} parent=1 // pred_check
      _
    $region11: #{tpu_custom_call.1} parent=1 // pred_check_branch
      %44 = sbr.rel (0) target = $region13
    $region12: #{tpu_custom_call.1} parent=1 // pred_region
      %46 = vsyncadd [#allocation4], 0
      %s48 = sshll.u32 [#allocation5], 4
      %s49 = int_to_ptr.vmem [resolvable:$true] %s48
      %s50 = sshll.u32 %s1, 4
      %s51 = int_to_ptr.hbm [resolvable:$true] %s50
      %53 = dma.vmem_to_hbm [thread:$0]  %s49, 128, %s51, [#allocation4]
    $region13: #{tpu_custom_call.1} parent=1 // pred_fallthru
      _
    // Predicated region
    $region14: #{tpu_custom_call.1} parent=1 // pred_check
      _
    $region15: #{tpu_custom_call.1} parent=1 // pred_check_branch
      %55 = sbr.rel (0) target = $region17
    $region16: #{tpu_custom_call.1} parent=1 // pred_region
      %57 = dma.done [#allocation4], 128
    $region17: #{tpu_custom_call.1} parent=1 // pred_fallthru
      _
    %58 = vsyncpa [#allocation3], 1
    %59 = vsyncpa [#allocation4], 1

</llo_original>
